<compile_context>
chip_gen: v7x
topology: tpu7x:2x2x1
jax: 0.10.0
libtpu: 0.0.40
codegen_flags: <defaults>
</compile_context>

<pallas_src>
import jax
import jax.numpy as jnp
from jax.experimental import pallas as pl
from jax.experimental.pallas import tpu as pltpu


# ----------------------------- Pallas kernel --------------------------------

def hyperdecoder_kernel(x_ref,
                        w1_ref, ba1_ref,
                        w2_ref, ba2_ref,
                        w3_ref, ba3_ref,
                        w4_ref, b4_ref,
                        o_ref):
    # x_ref: (TR, G*nic) tile of packed input-pixel rows (G pixels per row).
    x = x_ref[...].astype(jnp.float32)

    # ConvTranspose2d(nic, nic, 1, 1) == per-pixel matmul, then PReLU(nic).
    h = jnp.dot(x, w1_ref[...], preferred_element_type=jnp.float32) + ba1_ref[0:1, :]
    h = jnp.where(h >= 0.0, h, ba1_ref[1:2, :] * h)

    # ConvTranspose2d(nic, nlc, 2, 2): each pixel -> 2x2 block of nlc channels,
    # columns ordered (g, di, dj, c).  PReLU(nlc) alpha tiled over positions/group.
    h = jnp.dot(h, w2_ref[...], preferred_element_type=jnp.float32) + ba2_ref[0:1, :]
    h = jnp.where(h >= 0.0, h, ba2_ref[1:2, :] * h)

    # ConvTranspose2d(nlc, noc, 2, 2): block-diagonal over the G*4 intermediate pixels,
    # columns ordered (g, di, dj, ei, ej, c).
    h = jnp.dot(h, w3_ref[...], preferred_element_type=jnp.float32) + ba3_ref[0:1, :]
    h = jnp.where(h >= 0.0, h, ba3_ref[1:2, :] * h)

    # ConvTranspose2d(noc, noc, 1, 1): block-diagonal 1x1 over the G*16 output pixels.
    h = jnp.dot(h, w4_ref[...], preferred_element_type=jnp.float32) + b4_ref[...]

    o_ref[...] = h.astype(o_ref.dtype)


# ------------------------------ wrapper --------------------------------------

def _pick_tile_rows(p_rows, desired=512):
    """Largest row tile that divides p_rows, is a multiple of 8 (or the full extent),
    stays <= desired, and leaves >= 2 grid steps when possible (megacore sharding)."""
    if p_rows <= 8:
        return p_rows
    cap = min(desired, p_rows // 2)
    t = cap - cap % 8
    while t >= 8:
        if p_rows % t == 0:
            return t
        t -= 8
    return p_rows  # fall back to a single full-extent block


def hyperdecoder_pallas(x_nchw, params, *, group=4, tile_rows=512):
    """x_nchw: (N, nic, H, W) float32. Returns (N, noc, 4H, 4W) float32."""
    (w1, b1, a1), (w2, b2, a2), (w3, b3, a3), (w4, b4) = params
    N, nic, H, W = x_nchw.shape
    nlc = w2.shape[1]
    noc = w3.shape[1]
    P = N * H * W

    # Pixel-group size must divide the pixel count (shrink if needed for odd shapes).
    G = max(1, group)
    while P % G != 0:
        G //= 2
    PR = P // G                      # packed rows
    tr = _pick_tile_rows(PR, desired=tile_rows)
    assert PR % tr == 0

    f32 = jnp.float32
    eye_g = jnp.eye(G, dtype=f32)

    # --- flatten + pack input: NCHW -> NHWC -> (P/G, G*nic) (reshape is free)
    x_rows = jnp.transpose(x_nchw, (0, 2, 3, 1)).reshape(PR, G * nic)

    # --- build matmul-form, group-packed weights (plain JAX glue, traced once) ---
    # layer 1: 1x1 per pixel
    w1k = jnp.kron(eye_g, w1[:, :, 0, 0].astype(f32))                   # (G*nic, G*nic)
    ba1 = jnp.stack([jnp.tile(b1.astype(f32), G),
                     jnp.tile(a1.astype(f32), G)], axis=0)              # (2, G*nic)

    # layer 2: (nic, nlc, 2, 2) -> (nic, 4*nlc), columns (di, dj, c); block-diag over G.
    w2m = jnp.transpose(w2, (0, 2, 3, 1)).reshape(nic, 4 * nlc).astype(f32)
    w2k = jnp.kron(eye_g, w2m)                                          # (G*nic, G*4*nlc)
    ba2 = jnp.stack([jnp.tile(b2.astype(f32), 4 * G),
                     jnp.tile(a2.astype(f32), 4 * G)], axis=0)          # (2, G*4*nlc)

    # layer 3: (nlc, noc, 2, 2) -> (nlc, 4*noc); block-diag over the G*4 positions.
    w3m = jnp.transpose(w3, (0, 2, 3, 1)).reshape(nlc, 4 * noc).astype(f32)
    w3k = jnp.kron(jnp.eye(4 * G, dtype=f32), w3m)                      # (G*4*nlc, G*16*noc)
    ba3 = jnp.stack([jnp.tile(b3.astype(f32), 16 * G),
                     jnp.tile(a3.astype(f32), 16 * G)], axis=0)         # (2, G*16*noc)

    # layer 4: 1x1 per output pixel; block-diag over the G*16 positions.
    w4k = jnp.kron(jnp.eye(16 * G, dtype=f32), w4[:, :, 0, 0].astype(f32))
    b4r = jnp.tile(b4.astype(f32), 16 * G).reshape(1, G * 16 * noc)

    out_cols = G * 16 * noc
    grid = (PR // tr,)

    def full_spec(shape):
        # Constant block index -> VMEM-resident across all grid steps (no re-DMA).
        return pl.BlockSpec(shape, lambda i: (0, 0))

    out_rows = pl.pallas_call(
        hyperdecoder_kernel,
        out_shape=jax.ShapeDtypeStruct((PR, out_cols), jnp.float32),
        grid_spec=pltpu.PrefetchScalarGridSpec(
            num_scalar_prefetch=0,
            grid=grid,
            in_specs=[
                pl.BlockSpec((tr, G * nic), lambda i: (i, 0)),   # packed-pixel tile
                full_spec(w1k.shape), full_spec(ba1.shape),
                full_spec(w2k.shape), full_spec(ba2.shape),
                full_spec(w3k.shape), full_spec(ba3.shape),
                full_spec(w4k.shape), full_spec(b4r.shape),
            ],
            out_specs=pl.BlockSpec((tr, out_cols), lambda i: (i, 0)),
        ),
        compiler_params=pltpu.CompilerParams(
            dimension_semantics=("parallel",)),
    )(x_rows, w1k, ba1, w2k, ba2, w3k, ba3, w4k, b4r)

    # --- unpack + pixel-shuffle back to NCHW.
    # rows (after unpacking G) are pixels (n, i, j); cols per pixel are (di, dj, ei, ej, c).
    y = out_rows.reshape(N, H, W, 2, 2, 2, 2, noc)
    y = jnp.transpose(y, (0, 7, 1, 3, 5, 2, 4, 6))       # (N, c, i, di, ei, j, dj, ej)
    y = y.reshape(N, noc, 4 * H, 4 * W)
    return y


# --------------------------- pure-JAX reference -------------------------------

def _prelu(x, a):
    return jnp.where(x >= 0.0, x, a[None, :, None, None] * x)


def _conv_t_1x1(x, w, b):
    return jnp.einsum('ncij,co->noij', x, w[:, :, 0, 0]) + b[None, :, None, None]


def _conv_t_2x2_s2(x, w, b):
    # ConvTranspose2d(k=2, s=2, pad=0): out[n,o,2i+k,2j+l] = sum_c x[n,c,i,j]*w[c,o,k,l]+b[o]
    N, C, H, W = x.shape
    co = w.shape[1]
    t = jnp.einsum('ncij,cokl->noikjl', x, w)     # (N, co, H, 2, W, 2)
    return t.reshape(N, co, 2 * H, 2 * W) + b[None, :, None, None]


def hyperdecoder_ref(x, params):
    (w1, b1, a1), (w2, b2, a2), (w3, b3, a3), (w4, b4) = params
    h = _prelu(_conv_t_1x1(x, w1, b1), a1)
    h = _prelu(_conv_t_2x2_s2(h, w2, b2), a2)
    h = _prelu(_conv_t_2x2_s2(h, w3, b3), a3)
    return _conv_t_1x1(h, w4, b4)


# ---------------------------------- main --------------------------------------

if __name__ == "__main__":
    # Small shapes consistent with the module: HyperDecoder(in=8, latent=8, out=4)
    N, nic, nlc, noc, H, W = 2, 8, 8, 4, 8, 8

    key = jax.random.PRNGKey(0)
    ks = jax.random.split(key, 12)

    def nrm(k, shape, scale=0.1):
        return scale * jax.random.normal(k, shape, dtype=jnp.float32)

    # ConvTranspose2d weight layout: (in_channels, out_channels, kH, kW)
    w1 = nrm(ks[0], (nic, nic, 1, 1)); b1 = nrm(ks[1], (nic,))
    a1 = 0.1 + 0.3 * jax.random.uniform(ks[2], (nic,), dtype=jnp.float32)   # PReLU(nic)
    w2 = nrm(ks[3], (nic, nlc, 2, 2)); b2 = nrm(ks[4], (nlc,))
    a2 = 0.1 + 0.3 * jax.random.uniform(ks[5], (nlc,), dtype=jnp.float32)   # PReLU(nlc)
    w3 = nrm(ks[6], (nlc, noc, 2, 2)); b3 = nrm(ks[7], (noc,))
    a3 = 0.1 + 0.3 * jax.random.uniform(ks[8], (noc,), dtype=jnp.float32)   # PReLU(noc)
    w4 = nrm(ks[9], (noc, noc, 1, 1)); b4 = nrm(ks[10], (noc,))

    params = ((w1, b1, a1), (w2, b2, a2), (w3, b3, a3), (w4, b4))

    x = jax.random.normal(ks[11], (N, nic, H, W), dtype=jnp.float32)

    out = hyperdecoder_pallas(x, params, group=4, tile_rows=512)
    out = jax.block_until_ready(out)

    ref = hyperdecoder_ref(x, params)
    assert out.shape == (N, noc, 4 * H, 4 * W), out.shape
    assert jnp.allclose(out, ref, rtol=1e-4, atol=1e-4), float(jnp.max(jnp.abs(out - ref)))

    print("KERNEL_OK")
</pallas_src>

<mosaic_0001>
module attributes {stable_mosaic.version = 11 : i64} {
  func.func @hyperdecoder_kernel(%arg0: i32, %arg1: memref<16x32xf32, #tpu.memory_space<vmem>>, %arg2: memref<32x32xf32, #tpu.memory_space<vmem>>, %arg3: memref<2x32xf32, #tpu.memory_space<vmem>>, %arg4: memref<32x128xf32, #tpu.memory_space<vmem>>, %arg5: memref<2x128xf32, #tpu.memory_space<vmem>>, %arg6: memref<128x256xf32, #tpu.memory_space<vmem>>, %arg7: memref<2x256xf32, #tpu.memory_space<vmem>>, %arg8: memref<256x256xf32, #tpu.memory_space<vmem>>, %arg9: memref<1x256xf32, #tpu.memory_space<vmem>>, %arg10: memref<16x256xf32, #tpu.memory_space<vmem>>) attributes {dimension_semantics = [#tpu.dimension_semantics<parallel>], iteration_bounds = array<i64: 2>, scalar_prefetch = 0 : i64, scratch_operands = 0 : i64, tpu.core_type = #tpu.core_type<tc>, window_params = [{transform_indices = @transform_0, window_bounds = array<i64: 16, 32>}, {pipeline_mode = #tpu.pipeline_mode<synchronous>, transform_indices = @transform_1, window_bounds = array<i64: 32, 32>}, {pipeline_mode = #tpu.pipeline_mode<synchronous>, transform_indices = @transform_2, window_bounds = array<i64: 2, 32>}, {pipeline_mode = #tpu.pipeline_mode<synchronous>, transform_indices = @transform_3, window_bounds = array<i64: 32, 128>}, {pipeline_mode = #tpu.pipeline_mode<synchronous>, transform_indices = @transform_4, window_bounds = array<i64: 2, 128>}, {pipeline_mode = #tpu.pipeline_mode<synchronous>, transform_indices = @transform_5, window_bounds = array<i64: 128, 256>}, {pipeline_mode = #tpu.pipeline_mode<synchronous>, transform_indices = @transform_6, window_bounds = array<i64: 2, 256>}, {pipeline_mode = #tpu.pipeline_mode<synchronous>, transform_indices = @transform_7, window_bounds = array<i64: 256, 256>}, {pipeline_mode = #tpu.pipeline_mode<synchronous>, transform_indices = @transform_8, window_bounds = array<i64: 1, 256>}, {transform_indices = @transform_9, window_bounds = array<i64: 16, 256>}]} {
    %c0 = arith.constant 0 : index
    %c0_0 = arith.constant 0 : index
    %0 = vector.load %arg1[%c0, %c0_0] : memref<16x32xf32, #tpu.memory_space<vmem>>, vector<16x32xf32>
    %c0_1 = arith.constant 0 : index
    %c0_2 = arith.constant 0 : index
    %1 = vector.load %arg2[%c0_1, %c0_2] : memref<32x32xf32, #tpu.memory_space<vmem>>, vector<32x32xf32>
    %cst = arith.constant dense<0.000000e+00> : vector<16x32xf32>
    %2 = tpu.matmul %0, %1, %cst {dimension_numbers = #tpu.dot_dimension_numbers<[1], [0], [0], [1], [0, 0, 1, 1], [], []>} : vector<16x32xf32>, vector<32x32xf32>, vector<16x32xf32> -> vector<16x32xf32>
    %c0_3 = arith.constant 0 : index
    %c0_4 = arith.constant 0 : index
    %3 = vector.load %arg3[%c0_3, %c0_4] : memref<2x32xf32, #tpu.memory_space<vmem>>, vector<1x32xf32>
    %4 = vector.broadcast %3 : vector<1x32xf32> to vector<16x32xf32>
    %5 = arith.addf %2, %4 : vector<16x32xf32>
    %cst_5 = arith.constant 0.000000e+00 : f32
    %6 = vector.broadcast %cst_5 : f32 to vector<16x32xf32>
    %7 = arith.cmpf oge, %5, %6 : vector<16x32xf32>
    %c1 = arith.constant 1 : index
    %c0_6 = arith.constant 0 : index
    %8 = vector.load %arg3[%c1, %c0_6] : memref<2x32xf32, #tpu.memory_space<vmem>>, vector<1x32xf32>
    %9 = vector.broadcast %8 : vector<1x32xf32> to vector<16x32xf32>
    %10 = arith.mulf %9, %5 : vector<16x32xf32>
    %11 = arith.select %7, %5, %10 : vector<16x32xi1>, vector<16x32xf32>
    %c0_7 = arith.constant 0 : index
    %c0_8 = arith.constant 0 : index
    %12 = vector.load %arg4[%c0_7, %c0_8] : memref<32x128xf32, #tpu.memory_space<vmem>>, vector<32x128xf32>
    %cst_9 = arith.constant dense<0.000000e+00> : vector<16x128xf32>
    %13 = tpu.matmul %11, %12, %cst_9 {dimension_numbers = #tpu.dot_dimension_numbers<[1], [0], [0], [1], [0, 0, 1, 1], [], []>} : vector<16x32xf32>, vector<32x128xf32>, vector<16x128xf32> -> vector<16x128xf32>
    %c0_10 = arith.constant 0 : index
    %c0_11 = arith.constant 0 : index
    %14 = vector.load %arg5[%c0_10, %c0_11] : memref<2x128xf32, #tpu.memory_space<vmem>>, vector<1x128xf32>
    %15 = vector.broadcast %14 : vector<1x128xf32> to vector<16x128xf32>
    %16 = arith.addf %13, %15 : vector<16x128xf32>
    %cst_12 = arith.constant 0.000000e+00 : f32
    %17 = vector.broadcast %cst_12 : f32 to vector<16x128xf32>
    %18 = arith.cmpf oge, %16, %17 : vector<16x128xf32>
    %c1_13 = arith.constant 1 : index
    %c0_14 = arith.constant 0 : index
    %19 = vector.load %arg5[%c1_13, %c0_14] : memref<2x128xf32, #tpu.memory_space<vmem>>, vector<1x128xf32>
    %20 = vector.broadcast %19 : vector<1x128xf32> to vector<16x128xf32>
    %21 = arith.mulf %20, %16 : vector<16x128xf32>
    %22 = arith.select %18, %16, %21 : vector<16x128xi1>, vector<16x128xf32>
    %c0_15 = arith.constant 0 : index
    %c0_16 = arith.constant 0 : index
    %23 = vector.load %arg6[%c0_15, %c0_16] : memref<128x256xf32, #tpu.memory_space<vmem>>, vector<128x256xf32>
    %cst_17 = arith.constant dense<0.000000e+00> : vector<16x256xf32>
    %24 = tpu.matmul %22, %23, %cst_17 {dimension_numbers = #tpu.dot_dimension_numbers<[1], [0], [0], [1], [0, 0, 1, 1], [], []>} : vector<16x128xf32>, vector<128x256xf32>, vector<16x256xf32> -> vector<16x256xf32>
    %c0_18 = arith.constant 0 : index
    %c0_19 = arith.constant 0 : index
    %25 = vector.load %arg7[%c0_18, %c0_19] : memref<2x256xf32, #tpu.memory_space<vmem>>, vector<1x256xf32>
    %26 = vector.broadcast %25 : vector<1x256xf32> to vector<16x256xf32>
    %27 = arith.addf %24, %26 : vector<16x256xf32>
    %cst_20 = arith.constant 0.000000e+00 : f32
    %28 = vector.broadcast %cst_20 : f32 to vector<16x256xf32>
    %29 = arith.cmpf oge, %27, %28 : vector<16x256xf32>
    %c1_21 = arith.constant 1 : index
    %c0_22 = arith.constant 0 : index
    %30 = vector.load %arg7[%c1_21, %c0_22] : memref<2x256xf32, #tpu.memory_space<vmem>>, vector<1x256xf32>
    %31 = vector.broadcast %30 : vector<1x256xf32> to vector<16x256xf32>
    %32 = arith.mulf %31, %27 : vector<16x256xf32>
    %33 = arith.select %29, %27, %32 : vector<16x256xi1>, vector<16x256xf32>
    %c0_23 = arith.constant 0 : index
    %c0_24 = arith.constant 0 : index
    %34 = vector.load %arg8[%c0_23, %c0_24] : memref<256x256xf32, #tpu.memory_space<vmem>>, vector<256x256xf32>
    %cst_25 = arith.constant dense<0.000000e+00> : vector<16x256xf32>
    %35 = tpu.matmul %33, %34, %cst_25 {dimension_numbers = #tpu.dot_dimension_numbers<[1], [0], [0], [1], [0, 0, 1, 1], [], []>} : vector<16x256xf32>, vector<256x256xf32>, vector<16x256xf32> -> vector<16x256xf32>
    %c0_26 = arith.constant 0 : index
    %c0_27 = arith.constant 0 : index
    %36 = vector.load %arg9[%c0_26, %c0_27] : memref<1x256xf32, #tpu.memory_space<vmem>>, vector<1x256xf32>
    %37 = vector.broadcast %36 : vector<1x256xf32> to vector<16x256xf32>
    %38 = arith.addf %35, %37 : vector<16x256xf32>
    %c0_28 = arith.constant 0 : index
    %c0_29 = arith.constant 0 : index
    %39 = vector.load %arg10[%c0_28, %c0_29] : memref<16x256xf32, #tpu.memory_space<vmem>>, vector<16x256xf32>
    tpu.vector_store %arg10[%c0_28, %c0_29], %38 {strides = array<i32>} : memref<16x256xf32, #tpu.memory_space<vmem>>, vector<16x256xf32>,
    return
  }
  func.func @transform_0(%arg0: i32) -> (i32, i32) {
    %c0_i32 = arith.constant 0 : i32
    %c0_i32_0 = arith.constant 0 : i32
    return %arg0, %c0_i32 : i32, i32
  }
  func.func @transform_1(%arg0: i32) -> (i32, i32) {
    %c0_i32 = arith.constant 0 : i32
    %c0_i32_0 = arith.constant 0 : i32
    %c0_i32_1 = arith.constant 0 : i32
    return %c0_i32, %c0_i32_0 : i32, i32
  }
  func.func @transform_2(%arg0: i32) -> (i32, i32) {
    %c0_i32 = arith.constant 0 : i32
    %c0_i32_0 = arith.constant 0 : i32
    %c0_i32_1 = arith.constant 0 : i32
    return %c0_i32, %c0_i32_0 : i32, i32
  }
  func.func @transform_3(%arg0: i32) -> (i32, i32) {
    %c0_i32 = arith.constant 0 : i32
    %c0_i32_0 = arith.constant 0 : i32
    %c0_i32_1 = arith.constant 0 : i32
    return %c0_i32, %c0_i32_0 : i32, i32
  }
  func.func @transform_4(%arg0: i32) -> (i32, i32) {
    %c0_i32 = arith.constant 0 : i32
    %c0_i32_0 = arith.constant 0 : i32
    %c0_i32_1 = arith.constant 0 : i32
    return %c0_i32, %c0_i32_0 : i32, i32
  }
  func.func @transform_5(%arg0: i32) -> (i32, i32) {
    %c0_i32 = arith.constant 0 : i32
    %c0_i32_0 = arith.constant 0 : i32
    %c0_i32_1 = arith.constant 0 : i32
    return %c0_i32, %c0_i32_0 : i32, i32
  }
  func.func @transform_6(%arg0: i32) -> (i32, i32) {
    %c0_i32 = arith.constant 0 : i32
    %c0_i32_0 = arith.constant 0 : i32
    %c0_i32_1 = arith.constant 0 : i32
    return %c0_i32, %c0_i32_0 : i32, i32
  }
  func.func @transform_7(%arg0: i32) -> (i32, i32) {
    %c0_i32 = arith.constant 0 : i32
    %c0_i32_0 = arith.constant 0 : i32
    %c0_i32_1 = arith.constant 0 : i32
    return %c0_i32, %c0_i32_0 : i32, i32
  }
  func.func @transform_8(%arg0: i32) -> (i32, i32) {
    %c0_i32 = arith.constant 0 : i32
    %c0_i32_0 = arith.constant 0 : i32
    %c0_i32_1 = arith.constant 0 : i32
    return %c0_i32, %c0_i32_0 : i32, i32
  }
  func.func @transform_9(%arg0: i32) -> (i32, i32) {
    %c0_i32 = arith.constant 0 : i32
    %c0_i32_0 = arith.constant 0 : i32
    return %arg0, %c0_i32 : i32, i32
  }
}

</mosaic_0001>

<llo_original>
// kernel: tpu_custom_call.1
$region0: #{tpu_custom_call.1}
  #allocation0 [shape = 'u32[]', space=smem, size = 0x4, offset = 0x4, fixed_abs, tag = 'smem constant byte address 0x4 - core index']
  #allocation1 [shape = 'u32[144,128]{1,0:T(1,128)}', space=vmem, size = 0x12000, scoped, tag = 'internal scratch']
  %s0 = inlined_call_operand.hbm [shape: f32[32,32], index: 0, kind: input, shape index: {}]
  %s1 = inlined_call_operand.hbm [shape: f32[32,32], index: 1, kind: input, shape index: {}]
  %s2 = inlined_call_operand.vmem [shape: f32[2,32], index: 2, kind: input, shape index: {}]
  %s3 = inlined_call_operand.hbm [shape: f32[32,128], index: 3, kind: input, shape index: {}]
  %s4 = inlined_call_operand.vmem [shape: f32[2,128], index: 4, kind: input, shape index: {}]
  %s5 = inlined_call_operand.hbm [shape: f32[128,256], index: 5, kind: input, shape index: {}]
  %s6 = inlined_call_operand.vmem [shape: f32[2,256], index: 6, kind: input, shape index: {}]
  %s7 = inlined_call_operand.hbm [shape: f32[256,256], index: 7, kind: input, shape index: {}]
  %s8 = inlined_call_operand.vmem [shape: f32[1,256], index: 8, kind: input, shape index: {}]
  %s9 = inlined_call_operand.hbm [shape: f32[32,256], index: 9, kind: output, shape index: {}]
  %s10 = sld [smem:[#allocation0]]
  $region89: #{tpu_custom_call.1} parent=0
    _
  %s12 = ssub.s32 1, %s10
  %s13 = scalar_select 0, %s12, %s10
  $region1: #{tpu_custom_call.1} parent=0
    #allocation2 [shape = 'u8[16384]{0}', space=vmem, size = 0x4000, scoped, tag = 'input window, operand 0']
    #allocation3 [shape = 's32[2]{0}', space=sflag, size = 0x8, scoped, tag = 'scoped memory for tpu_custom_call.1']
    #allocation4 [shape = 's32[2]{0}', space=sflag, size = 0x8, scoped, tag = 'scoped memory for tpu_custom_call.1']
    #allocation5 [shape = 'u8[16384]{0}', space=vmem, size = 0x4000, scoped, tag = 'input window, operand 1, single buffered']
    #allocation6 [shape = 's32[1]{0}', space=sflag, size = 0x4, scoped, tag = 'scoped memory for tpu_custom_call.1']
    #allocation7 [shape = 'u8[16384]{0}', space=vmem, size = 0x4000, scoped, tag = 'input window, operand 3, single buffered']
    #allocation8 [shape = 'u8[131072]{0}', space=vmem, size = 0x20000, scoped, tag = 'input window, operand 5, single buffered']
    #allocation9 [shape = 's32[1]{0}', space=sflag, size = 0x4, scoped, tag = 'scoped memory for tpu_custom_call.1']
    #allocation10 [shape = 'u8[262144]{0}', space=vmem, size = 0x40000, scoped, tag = 'input window, operand 7, single buffered']
    #allocation11 [shape = 'u8[32768]{0}', space=vmem, size = 0x8000, scoped, tag = 'output window, operand 0']
    %14 = vsyncpa [#allocation3], 0
    %s15 = scalar_lea.sflag [#allocation3], 1
    %16 = vsyncpa %s15, 0
    %17 = vsyncpa [#allocation6], 0
    %18 = vsyncpa [#allocation9], 0
    %19 = vsyncpa [#allocation4], 0
    %s20 = scalar_lea.sflag [#allocation4], 1
    %21 = vsyncpa %s20, 0
    loop: start=0, step=1, limit=4
    $region2: #{tpu_custom_call.1} parent=1 // loop_pre_header
      _
    $region3: #{tpu_custom_call.1} parent=1 // loop_header
      %s23 = sphi 0, %s27
      %p24 = scmp.ge.s32.totalorder %s23, 4
      %s33 = sphi 0, %s35
      %s36 = sphi 0, %s33
      %s37 = sphi 0, %s36
      %s53 = sphi 0, %s37
      %s57 = sphi 0, %s57
      %s59 = sphi 0, %s57
      %s60 = sphi 0, %s59
      %s74 = sphi 0, %s60
      %s78 = sphi 0, %s78
      %s80 = sphi 0, %s78
      %s81 = sphi 0, %s80
      %s95 = sphi 0, %s81
      %s99 = sphi 0, %s99
      %s101 = sphi 0, %s99
      %s102 = sphi 0, %s101
      %s116 = sphi 0, %s102
      %s120 = sphi 0, %s120
      %s122 = sphi 0, %s120
      %s123 = sphi 0, %s122
      %s137 = sphi 0, %s123
      %s141 = sphi 0, %s141
      %s143 = sphi 0, %s141
      %s144 = sphi 0, %s143
      %s158 = sphi 0, %s144
      %s162 = sphi 0, %s162
      %s164 = sphi 0, %s162
      %s165 = sphi 0, %s164
      %s179 = sphi 0, %s165
      %s183 = sphi 0, %s183
      %s185 = sphi 0, %s183
      %s186 = sphi 0, %s185
      %s200 = sphi 0, %s186
      %s204 = sphi 0, %s204
      %s206 = sphi 0, %s204
      %s207 = sphi 0, %s206
      %s221 = sphi 0, %s207
      %s227 = sphi 0, %s229
      %s230 = sphi 0, %s227
      %s231 = sphi 0, %s230
      %s247 = sphi 0, %s231
    $region4: #{tpu_custom_call.1} parent=1 // loop_header_branch
      %26 = sbr.rel (%p24) target = $region8
    $region5: #{tpu_custom_call.1} parent=1 // loop_body
      %s28 = ssub.s32 %s23, 1
      %s29 = ssub.s32 %s23, 2
      %s30 = sadd.s32 %s23, 1
      %s31 = ssub.s32 %s23, %s30
      %p32 = scmp.eq.s32.totalorder %s31, 0
      %s34 = sadd.s32 %s33, 1
      %s35 = scalar_select %p32, %s33, %s34
      %p38 = pneg %p32
      %p39 = scmp.eq.s32.totalorder %s23, 1
      %p40 = por %p38, %p39
      %p41 = scmp.ne.s32.totalorder %s33, %s36
      %p42 = scmp.eq.s32.totalorder %s23, 0
      %p43 = por %p41, %p42
      %p44 = scmp.ne.s32.totalorder %s33, %s36
      %p45 = scmp.eq.s32.totalorder %s28, 1
      %p46 = por %p44, %p45
      %p47 = scmp.ne.s32.totalorder %s36, %s37
      %p48 = scmp.eq.s32.totalorder %s28, 0
      %p49 = por %p47, %p48
      %p50 = scmp.ne.s32.totalorder %s36, %s37
      %p51 = scmp.eq.s32.totalorder %s29, 1
      %p52 = por %p50, %p51
      %p54 = scmp.ne.s32.totalorder %s37, %s53
      %p55 = scmp.eq.s32.totalorder %s29, 0
      %p56 = por %p54, %p55
      %s58 = sadd.s32 %s57, 1
      %p61 = scmp.eq.s32.totalorder %s23, 1
      %p62 = scmp.ne.s32.totalorder %s57, %s59
      %p63 = scmp.eq.s32.totalorder %s23, 0
      %p64 = por %p62, %p63
      %p65 = scmp.ne.s32.totalorder %s57, %s59
      %p66 = scmp.eq.s32.totalorder %s28, 1
      %p67 = por %p65, %p66
      %p68 = scmp.ne.s32.totalorder %s59, %s60
      %p69 = scmp.eq.s32.totalorder %s28, 0
      %p70 = por %p68, %p69
      %p71 = scmp.ne.s32.totalorder %s59, %s60
      %p72 = scmp.eq.s32.totalorder %s29, 1
      %p73 = por %p71, %p72
      %p75 = scmp.ne.s32.totalorder %s60, %s74
      %p76 = scmp.eq.s32.totalorder %s29, 0
      %p77 = por %p75, %p76
      %s79 = sadd.s32 %s78, 1
      %p82 = scmp.eq.s32.totalorder %s23, 1
      %p83 = scmp.ne.s32.totalorder %s78, %s80
      %p84 = scmp.eq.s32.totalorder %s23, 0
      %p85 = por %p83, %p84
      %p86 = scmp.ne.s32.totalorder %s78, %s80
      %p87 = scmp.eq.s32.totalorder %s28, 1
      %p88 = por %p86, %p87
      %p89 = scmp.ne.s32.totalorder %s80, %s81
      %p90 = scmp.eq.s32.totalorder %s28, 0
      %p91 = por %p89, %p90
      %p92 = scmp.ne.s32.totalorder %s80, %s81
      %p93 = scmp.eq.s32.totalorder %s29, 1
      %p94 = por %p92, %p93
      %p96 = scmp.ne.s32.totalorder %s81, %s95
      %p97 = scmp.eq.s32.totalorder %s29, 0
      %p98 = por %p96, %p97
      %s100 = sadd.s32 %s99, 1
      %p103 = scmp.eq.s32.totalorder %s23, 1
      %p104 = scmp.ne.s32.totalorder %s99, %s101
      %p105 = scmp.eq.s32.totalorder %s23, 0
      %p106 = por %p104, %p105
      %p107 = scmp.ne.s32.totalorder %s99, %s101
      %p108 = scmp.eq.s32.totalorder %s28, 1
      %p109 = por %p107, %p108
      %p110 = scmp.ne.s32.totalorder %s101, %s102
      %p111 = scmp.eq.s32.totalorder %s28, 0
      %p112 = por %p110, %p111
      %p113 = scmp.ne.s32.totalorder %s101, %s102
      %p114 = scmp.eq.s32.totalorder %s29, 1
      %p115 = por %p113, %p114
      %p117 = scmp.ne.s32.totalorder %s102, %s116
      %p118 = scmp.eq.s32.totalorder %s29, 0
      %p119 = por %p117, %p118
      %s121 = sadd.s32 %s120, 1
      %p124 = scmp.eq.s32.totalorder %s23, 1
      %p125 = scmp.ne.s32.totalorder %s120, %s122
      %p126 = scmp.eq.s32.totalorder %s23, 0
      %p127 = por %p125, %p126
      %p128 = scmp.ne.s32.totalorder %s120, %s122
      %p129 = scmp.eq.s32.totalorder %s28, 1
      %p130 = por %p128, %p129
      %p131 = scmp.ne.s32.totalorder %s122, %s123
      %p132 = scmp.eq.s32.totalorder %s28, 0
      %p133 = por %p131, %p132
      %p134 = scmp.ne.s32.totalorder %s122, %s123
      %p135 = scmp.eq.s32.totalorder %s29, 1
      %p136 = por %p134, %p135
      %p138 = scmp.ne.s32.totalorder %s123, %s137
      %p139 = scmp.eq.s32.totalorder %s29, 0
      %p140 = por %p138, %p139
      %s142 = sadd.s32 %s141, 1
      %p145 = scmp.eq.s32.totalorder %s23, 1
      %p146 = scmp.ne.s32.totalorder %s141, %s143
      %p147 = scmp.eq.s32.totalorder %s23, 0
      %p148 = por %p146, %p147
      %p149 = scmp.ne.s32.totalorder %s141, %s143
      %p150 = scmp.eq.s32.totalorder %s28, 1
      %p151 = por %p149, %p150
      %p152 = scmp.ne.s32.totalorder %s143, %s144
      %p153 = scmp.eq.s32.totalorder %s28, 0
      %p154 = por %p152, %p153
      %p155 = scmp.ne.s32.totalorder %s143, %s144
      %p156 = scmp.eq.s32.totalorder %s29, 1
      %p157 = por %p155, %p156
      %p159 = scmp.ne.s32.totalorder %s144, %s158
      %p160 = scmp.eq.s32.totalorder %s29, 0
      %p161 = por %p159, %p160
      %s163 = sadd.s32 %s162, 1
      %p166 = scmp.eq.s32.totalorder %s23, 1
      %p167 = scmp.ne.s32.totalorder %s162, %s164
      %p168 = scmp.eq.s32.totalorder %s23, 0
      %p169 = por %p167, %p168
      %p170 = scmp.ne.s32.totalorder %s162, %s164
      %p171 = scmp.eq.s32.totalorder %s28, 1
      %p172 = por %p170, %p171
      %p173 = scmp.ne.s32.totalorder %s164, %s165
      %p174 = scmp.eq.s32.totalorder %s28, 0
      %p175 = por %p173, %p174
      %p176 = scmp.ne.s32.totalorder %s164, %s165
      %p177 = scmp.eq.s32.totalorder %s29, 1
      %p178 = por %p176, %p177
      %p180 = scmp.ne.s32.totalorder %s165, %s179
      %p181 = scmp.eq.s32.totalorder %s29, 0
      %p182 = por %p180, %p181
      %s184 = sadd.s32 %s183, 1
      %p187 = scmp.eq.s32.totalorder %s23, 1
      %p188 = scmp.ne.s32.totalorder %s183, %s185
      %p189 = scmp.eq.s32.totalorder %s23, 0
      %p190 = por %p188, %p189
      %p191 = scmp.ne.s32.totalorder %s183, %s185
      %p192 = scmp.eq.s32.totalorder %s28, 1
      %p193 = por %p191, %p192
      %p194 = scmp.ne.s32.totalorder %s185, %s186
      %p195 = scmp.eq.s32.totalorder %s28, 0
      %p196 = por %p194, %p195
      %p197 = scmp.ne.s32.totalorder %s185, %s186
      %p198 = scmp.eq.s32.totalorder %s29, 1
      %p199 = por %p197, %p198
      %p201 = scmp.ne.s32.totalorder %s186, %s200
      %p202 = scmp.eq.s32.totalorder %s29, 0
      %p203 = por %p201, %p202
      %s205 = sadd.s32 %s204, 1
      %p208 = scmp.eq.s32.totalorder %s23, 1
      %p209 = scmp.ne.s32.totalorder %s204, %s206
      %p210 = scmp.eq.s32.totalorder %s23, 0
      %p211 = por %p209, %p210
      %p212 = scmp.ne.s32.totalorder %s204, %s206
      %p213 = scmp.eq.s32.totalorder %s28, 1
      %p214 = por %p212, %p213
      %p215 = scmp.ne.s32.totalorder %s206, %s207
      %p216 = scmp.eq.s32.totalorder %s28, 0
      %p217 = por %p215, %p216
      %p218 = scmp.ne.s32.totalorder %s206, %s207
      %p219 = scmp.eq.s32.totalorder %s29, 1
      %p220 = por %p218, %p219
      %p222 = scmp.ne.s32.totalorder %s207, %s221
      %p223 = scmp.eq.s32.totalorder %s29, 0
      %p224 = por %p222, %p223
      %s225 = ssub.s32 %s23, %s30
      %p226 = scmp.eq.s32.totalorder %s225, 0
      %s228 = sadd.s32 %s227, 1
      %s229 = scalar_select %p226, %s227, %s228
      %p232 = pneg %p226
      %p233 = scmp.eq.s32.totalorder %s23, 1
      %p234 = por %p232, %p233
      %p235 = scmp.ne.s32.totalorder %s227, %s230
      %p236 = scmp.eq.s32.totalorder %s23, 0
      %p237 = por %p235, %p236
      %p238 = scmp.ne.s32.totalorder %s227, %s230
      %p239 = scmp.eq.s32.totalorder %s28, 1
      %p240 = por %p238, %p239
      %p241 = scmp.ne.s32.totalorder %s230, %s231
      %p242 = scmp.eq.s32.totalorder %s28, 0
      %p243 = por %p241, %p242
      %p244 = scmp.ne.s32.totalorder %s230, %s231
      %p245 = scmp.eq.s32.totalorder %s29, 1
      %p246 = por %p244, %p245
      %p248 = scmp.ne.s32.totalorder %s231, %s247
      %p249 = scmp.eq.s32.totalorder %s29, 0
      %p250 = por %p248, %p249
      %p251 = scmp.le.s32.totalorder 1, %s23
      %p252 = scmp.lt.s32.totalorder %s23, 3
      %p253 = pnand %p251, %p252
      %p254 = pneg %p253
      // Predicated region
      $region9: #{tpu_custom_call.1} parent=5 // pred_check
        _
      $region10: #{tpu_custom_call.1} parent=5 // pred_check_branch
        %256 = sbr.rel (%p253) target = $region12
      $region11: #{tpu_custom_call.1} parent=5 // pred_region
        %s257 = ssub.s32 %s23, 1
        // Predicated region
        $region13: #{tpu_custom_call.1} parent=11 // pred_check
          %p258 = pneg %p70
        $region14: #{tpu_custom_call.1} parent=11 // pred_check_branch
          %260 = sbr.rel (%p258) target = $region16
        $region15: #{tpu_custom_call.1} parent=11 // pred_region
          %s262 = ssub.s32 512, 512
          %263 = vsyncadd [#allocation6], %s262
          %s264 = sshll.u32 [#allocation5], 4
          %s265 = int_to_ptr.vmem [resolvable:$true] %s264
          %270 = dma.hbm_to_vmem [thread:$0]  %s1, 512, %s265, [#allocation6], 128, 128, 8
        $region16: #{tpu_custom_call.1} parent=11 // pred_fallthru
          _
        // Predicated region
        $region17: #{tpu_custom_call.1} parent=11 // pred_check
          %p271 = pneg %p91
        $region18: #{tpu_custom_call.1} parent=11 // pred_check_branch
          %273 = sbr.rel (%p271) target = $region20
        $region19: #{tpu_custom_call.1} parent=11 // pred_region
          _
        $region20: #{tpu_custom_call.1} parent=11 // pred_fallthru
          _
        // Predicated region
        $region21: #{tpu_custom_call.1} parent=11 // pred_check
          %p274 = pneg %p112
        $region22: #{tpu_custom_call.1} parent=11 // pred_check_branch
          %276 = sbr.rel (%p274) target = $region24
        $region23: #{tpu_custom_call.1} parent=11 // pred_region
          %s278 = ssub.s32 512, 512
          %279 = vsyncadd [#allocation6], %s278
          %s280 = sshll.u32 [#allocation7], 4
          %s281 = int_to_ptr.vmem [resolvable:$true] %s280
          %286 = dma.hbm_to_vmem [thread:$0]  %s3, 512, %s281, [#allocation6], 128, 128, 8
        $region24: #{tpu_custom_call.1} parent=11 // pred_fallthru
          _
        // Predicated region
        $region25: #{tpu_custom_call.1} parent=11 // pred_check
          %p287 = pneg %p133
        $region26: #{tpu_custom_call.1} parent=11 // pred_check_branch
          %289 = sbr.rel (%p287) target = $region28
        $region27: #{tpu_custom_call.1} parent=11 // pred_region
          _
        $region28: #{tpu_custom_call.1} parent=11 // pred_fallthru
          _
        // Predicated region
        $region29: #{tpu_custom_call.1} parent=11 // pred_check
          %p290 = pneg %p154
        $region30: #{tpu_custom_call.1} parent=11 // pred_check_branch
          %292 = sbr.rel (%p290) target = $region32
        $region31: #{tpu_custom_call.1} parent=11 // pred_region
          %s294 = ssub.s32 4096, 4096
          %295 = vsyncadd [#allocation9], %s294
          %s296 = sshll.u32 [#allocation8], 4
          %s297 = int_to_ptr.vmem [resolvable:$true] %s296
          %302 = dma.hbm_to_vmem [thread:$0]  %s5, 4096, %s297, [#allocation9], 256, 256, 16
        $region32: #{tpu_custom_call.1} parent=11 // pred_fallthru
          _
        // Predicated region
        $region33: #{tpu_custom_call.1} parent=11 // pred_check
          %p303 = pneg %p175
        $region34: #{tpu_custom_call.1} parent=11 // pred_check_branch
          %305 = sbr.rel (%p303) target = $region36
        $region35: #{tpu_custom_call.1} parent=11 // pred_region
          _
        $region36: #{tpu_custom_call.1} parent=11 // pred_fallthru
          _
        // Predicated region
        $region37: #{tpu_custom_call.1} parent=11 // pred_check
          %p306 = pneg %p196
        $region38: #{tpu_custom_call.1} parent=11 // pred_check_branch
          %308 = sbr.rel (%p306) target = $region40
        $region39: #{tpu_custom_call.1} parent=11 // pred_region
          %s310 = ssub.s32 8192, 8192
          %311 = vsyncadd [#allocation9], %s310
          %s312 = sshll.u32 [#allocation10], 4
          %s313 = int_to_ptr.vmem [resolvable:$true] %s312
          %318 = dma.hbm_to_vmem [thread:$0]  %s7, 8192, %s313, [#allocation9], 256, 256, 16
        $region40: #{tpu_custom_call.1} parent=11 // pred_fallthru
          _
        // Predicated region
        $region41: #{tpu_custom_call.1} parent=11 // pred_check
          %p319 = pneg %p217
        $region42: #{tpu_custom_call.1} parent=11 // pred_check_branch
          %321 = sbr.rel (%p319) target = $region44
        $region43: #{tpu_custom_call.1} parent=11 // pred_region
          _
        $region44: #{tpu_custom_call.1} parent=11 // pred_fallthru
          _
      $region12: #{tpu_custom_call.1} parent=5 // pred_fallthru
        _
      %p322 = scmp.lt.s32.totalorder %s23, 2
      // Predicated region
      $region45: #{tpu_custom_call.1} parent=5 // pred_check
        %p323 = pneg %p322
      $region46: #{tpu_custom_call.1} parent=5 // pred_check_branch
        %325 = sbr.rel (%p323) target = $region48
      $region47: #{tpu_custom_call.1} parent=5 // pred_region
        // Predicated region
        $region49: #{tpu_custom_call.1} parent=47 // pred_check
          %p326 = pneg %p43
        $region50: #{tpu_custom_call.1} parent=47 // pred_check_branch
          %328 = sbr.rel (%p326) target = $region52
        $region51: #{tpu_custom_call.1} parent=47 // pred_region
          %s329 = sand.u32 %s33, 1
          %s330 = scalar_lea.sflag [#allocation3], %s329
          %s331 = sand.u32 %s33, 1
          %s332 = smul.addr %s331, 16
          %s333 = scalar_lea.vmem [#allocation2], %s332
          %s334 = smul.u32 2, %s23
          %s336 = ssub.s32 256, 256
          %337 = vsyncadd %s330, %s336
          %s338 = smul.addr %s334, 128
          %s339 = scalar_lea.hbm %s0, %s338
          %s340 = sshll.u32 %s333, 4
          %s341 = int_to_ptr.vmem [resolvable:$true] %s340
          %346 = dma.hbm_to_vmem [thread:$0]  %s339, 256, %s341, %s330, 128, 128, 8
        $region52: #{tpu_custom_call.1} parent=47 // pred_fallthru
          _
      $region48: #{tpu_custom_call.1} parent=5 // pred_fallthru
        _
      %p347 = scmp.le.s32.totalorder 1, %s23
      %p348 = scmp.lt.s32.totalorder %s23, 3
      %p349 = pnand %p347, %p348
      %p350 = pneg %p349
      // Predicated region
      $region53: #{tpu_custom_call.1} parent=5 // pred_check
        _
      $region54: #{tpu_custom_call.1} parent=5 // pred_check_branch
        %352 = sbr.rel (%p349) target = $region56
      $region55: #{tpu_custom_call.1} parent=5 // pred_region
        %s353 = ssub.s32 %s23, 1
        %s354 = sand.u32 %s36, 1
        %s355 = scalar_lea.sflag [#allocation3], %s354
        %s356 = sand.u32 %s36, 1
        %s357 = smul.addr %s356, 16
        %s358 = scalar_lea.vmem [#allocation2], %s357
        // Predicated region
        $region57: #{tpu_custom_call.1} parent=55 // pred_check
          %p359 = pneg %p49
        $region58: #{tpu_custom_call.1} parent=55 // pred_check_branch
          %361 = sbr.rel (%p359) target = $region60
        $region59: #{tpu_custom_call.1} parent=55 // pred_region
          %362 = dma.done %s355, 256
        $region60: #{tpu_custom_call.1} parent=55 // pred_fallthru
          _
        // Predicated region
        $region61: #{tpu_custom_call.1} parent=55 // pred_check
          %p363 = pneg %p70
        $region62: #{tpu_custom_call.1} parent=55 // pred_check_branch
          %365 = sbr.rel (%p363) target = $region64
        $region63: #{tpu_custom_call.1} parent=55 // pred_region
          %366 = dma.done [#allocation6], 512
        $region64: #{tpu_custom_call.1} parent=55 // pred_fallthru
          _
        // Predicated region
        $region65: #{tpu_custom_call.1} parent=55 // pred_check
          %p367 = pneg %p112
        $region66: #{tpu_custom_call.1} parent=55 // pred_check_branch
          %369 = sbr.rel (%p367) target = $region68
        $region67: #{tpu_custom_call.1} parent=55 // pred_region
          %370 = dma.done [#allocation6], 512
        $region68: #{tpu_custom_call.1} parent=55 // pred_fallthru
          _
        // Predicated region
        $region69: #{tpu_custom_call.1} parent=55 // pred_check
          %p371 = pneg %p154
        $region70: #{tpu_custom_call.1} parent=55 // pred_check_branch
          %373 = sbr.rel (%p371) target = $region72
        $region71: #{tpu_custom_call.1} parent=55 // pred_region
          %374 = dma.done [#allocation9], 4096
        $region72: #{tpu_custom_call.1} parent=55 // pred_fallthru
          _
        // Predicated region
        $region73: #{tpu_custom_call.1} parent=55 // pred_check
          %p375 = pneg %p196
        $region74: #{tpu_custom_call.1} parent=55 // pred_check_branch
          %377 = sbr.rel (%p375) target = $region76
        $region75: #{tpu_custom_call.1} parent=55 // pred_region
          %378 = dma.done [#allocation9], 8192
        $region76: #{tpu_custom_call.1} parent=55 // pred_fallthru
          _
        %s379 = sand.u32 %s36, 1
        %s380 = scalar_lea.sflag [#allocation3], %s379
        %s381 = sand.u32 %s36, 1
        %s382 = smul.addr %s381, 16
        %s383 = scalar_lea.vmem [#allocation2], %s382
        %p384 = pneg %p49
        %p385 = pneg %p46
        %p386 = pneg %p70
        %p387 = pneg %p67
        %p388 = pneg %p91
        %p389 = pneg %p88
        %p390 = pneg %p112
        %p391 = pneg %p109
        %p392 = pneg %p133
        %p393 = pneg %p130
        %p394 = pneg %p154
        %p395 = pneg %p151
        %p396 = pneg %p175
        %p397 = pneg %p172
        %p398 = pneg %p196
        %p399 = pneg %p193
        %p400 = pneg %p217
        %p401 = pneg %p214
        %p402 = pneg %p243
        %p403 = pneg %p240
        %s404 = sand.u32 %s230, 1
        %s405 = scalar_lea.sflag [#allocation4], %s404
        %s406 = sand.u32 %s230, 1
        %s407 = smul.addr %s406, 32
        %s408 = scalar_lea.vmem [#allocation11], %s407
        %s409 = smul.u32 2, %s28
        %s410 = smul.u32 2, %s28
        %v411 = vld [vmem:[%s358] sm:$0xff]
        %v412 = vld [vmem:[%s358 + $0x8] sm:$0xff]
        %v413 = vld [vmem:[#allocation5] sm:$0xff]
        %v414 = vld [vmem:[#allocation5 + $0x8] sm:$0xff]
        %v415 = vld [vmem:[#allocation5 + $0x10] sm:$0xff]
        %v416 = vld [vmem:[#allocation5 + $0x18] sm:$0xff]
        %v417 = vld [vmem:[%s2] sm:$0x1]
        %v418 = vlaneseq
        %v419 = vshrl.u32 %v418, 7
        %v420 = vsub.s32 0, %v419
        %v421 = vrot.slane %v417, %v420
        %vm422 = vcmask 261120
        %v424 = vsel %vm422, %v411, 0
        %v427 = vsel %vm422, %v412, 0
        %429 = vmatprep.subr.mxu0 0.0
        %430 = vmatpush1.msra.mxu0 %v413
        %431 = vmatprep.subr.mxu0 0.0
        %432 = vmatpush1.msra.mxu0 %v414
        %433 = vmatprep.subr.mxu0 0.0
        %434 = vmatpush1.msra.mxu0 %v415
        %435 = vmatprep.subr.mxu0 0.0
        %436 = vmatpush1.msra.mxu0 %v416
        %437 = vmatprep.subr.mxu0 0.0
        %438 = vmatpush1.msra.mxu0 0.0
        %439 = vmatprep.subr.mxu0 0.0
        %440 = vmatpush1.msra.mxu0 0.0
        %441 = vmatprep.subr.mxu0 0.0
        %442 = vmatpush1.msra.mxu0 0.0
        %443 = vmatprep.subr.mxu0 0.0
        %444 = vmatpush1.msra.mxu0 0.0
        %445 = vmatprep.subr.mxu0 0.0
        %446 = vmatpush1.msra.mxu0 0.0
        %447 = vmatprep.subr.mxu0 0.0
        %448 = vmatpush1.msra.mxu0 0.0
        %449 = vmatprep.subr.mxu0 0.0
        %450 = vmatpush1.msra.mxu0 0.0
        %451 = vmatprep.subr.mxu0 0.0
        %452 = vmatpush1.msra.mxu0 0.0
        %453 = vmatprep.subr.mxu0 0.0
        %454 = vmatpush1.msra.mxu0 0.0
        %455 = vmatprep.subr.mxu0 0.0
        %456 = vmatpush1.msra.mxu0 0.0
        %457 = vmatprep.subr.mxu0 0.0
        %458 = vmatpush1.msra.mxu0 0.0
        %459 = vmatprep.subr.mxu0 0.0
        %460 = vmatpush1.msra.mxu0 0.0
        %461 = vmatprep.subr.mxu0 0.0
        %462 = vmatpush1.msra.mxu0 0.0
        %463 = vmatprep.subr.mxu0 0.0
        %464 = vmatpush1.msra.mxu0 0.0
        %465 = vmatprep.subr.mxu0 0.0
        %466 = vmatpush1.msra.mxu0 0.0
        %467 = vmatprep.subr.mxu0 0.0
        %468 = vmatpush1.msra.mxu0 0.0
        %469 = vmatprep.subr.mxu0 0.0
        %470 = vmatpush1.msra.mxu0 0.0
        %471 = vmatprep.subr.mxu0 0.0
        %472 = vmatpush1.msra.mxu0 0.0
        %473 = vmatprep.subr.mxu0 0.0
        %474 = vmatpush1.msra.mxu0 0.0
        %475 = vmatprep.subr.mxu0 0.0
        %476 = vmatpush1.msra.mxu0 0.0
        %477 = vmatprep.subr.mxu0 0.0
        %478 = vmatpush1.msra.mxu0 0.0
        %479 = vmatprep.subr.mxu0 0.0
        %480 = vmatpush1.msra.mxu0 0.0
        %481 = vmatprep.subr.mxu0 0.0
        %482 = vmatpush1.msra.mxu0 0.0
        %483 = vmatprep.subr.mxu0 0.0
        %484 = vmatpush1.msra.mxu0 0.0
        %485 = vmatprep.subr.mxu0 0.0
        %486 = vmatpush1.msra.mxu0 0.0
        %487 = vmatprep.subr.mxu0 0.0
        %488 = vmatpush1.msra.mxu0 0.0
        %489 = vmatprep.subr.mxu0 0.0
        %490 = vmatpush1.msra.mxu0 0.0
        %491 = vmatprep.subr.mxu0 0.0
        %492 = vmatpush1.msra.mxu0 0.0
        %493 = vmatprep.mubr.f32.mxu0 0.0
        %494 = vmatmul.mubr.f32.gmra.mrb[0].mxu0 %v424
        %v495 = vpop.f32.mrb[0].mxu0
        %v496 = vadd.f32 %v421, %v495
        %v497 = vpop.f32.mrb[0].mxu0
        %498 = vmatprep.mubr.f32.mxu0 0.0
        %499 = vmatmul.mubr.f32.gmra.mrb[0].mxu0 %v427
        %v500 = vpop.f32.mrb[0].mxu0
        %v501 = vadd.f32 %v421, %v500
        %v502 = vpop.f32.mrb[0].mxu0
        %503 = vdwg.mxu0
        %vm504 = vcmp.ge.f32.partialorder %v496, 0.0
        %vm505 = vcmp.ge.f32.partialorder %v501, 0.0
        %v506 = vld [vmem:[%s2 + $0x1] sm:$0x1]
        %v507 = vlaneseq
        %v508 = vshrl.u32 %v507, 7
        %v509 = vsub.s32 0, %v508
        %v510 = vrot.slane %v506, %v509
        %v511 = vmul.f32 %v510, %v496
        %v512 = vmul.f32 %v510, %v501
        %v513 = vsel %vm504, %v496, %v511
        %v514 = vsel %vm505, %v501, %v512
        %v515 = vld [vmem:[#allocation7] sm:$0xff]
        %v516 = vld [vmem:[#allocation7 + $0x8] sm:$0xff]
        %v517 = vld [vmem:[#allocation7 + $0x10] sm:$0xff]
        %v518 = vld [vmem:[#allocation7 + $0x18] sm:$0xff]
        %v519 = vld [vmem:[%s4] sm:$0x1]
        %v520 = vlaneseq
        %v521 = vshrl.u32 %v520, 7
        %v522 = vsub.s32 0, %v521
        %v523 = vrot.slane %v519, %v522
        %v525 = vsel %vm422, %v513, 0
        %v528 = vsel %vm422, %v514, 0
        %530 = vmatprep.subr.mxu0 0.0
        %531 = vmatpush1.msra.mxu0 %v515
        %532 = vmatprep.subr.mxu0 0.0
        %533 = vmatpush1.msra.mxu0 %v516
        %534 = vmatprep.subr.mxu0 0.0
        %535 = vmatpush1.msra.mxu0 %v517
        %536 = vmatprep.subr.mxu0 0.0
        %537 = vmatpush1.msra.mxu0 %v518
        %538 = vmatprep.subr.mxu0 0.0
        %539 = vmatpush1.msra.mxu0 0.0
        %540 = vmatprep.subr.mxu0 0.0
        %541 = vmatpush1.msra.mxu0 0.0
        %542 = vmatprep.subr.mxu0 0.0
        %543 = vmatpush1.msra.mxu0 0.0
        %544 = vmatprep.subr.mxu0 0.0
        %545 = vmatpush1.msra.mxu0 0.0
        %546 = vmatprep.subr.mxu0 0.0
        %547 = vmatpush1.msra.mxu0 0.0
        %548 = vmatprep.subr.mxu0 0.0
        %549 = vmatpush1.msra.mxu0 0.0
        %550 = vmatprep.subr.mxu0 0.0
        %551 = vmatpush1.msra.mxu0 0.0
        %552 = vmatprep.subr.mxu0 0.0
        %553 = vmatpush1.msra.mxu0 0.0
        %554 = vmatprep.subr.mxu0 0.0
        %555 = vmatpush1.msra.mxu0 0.0
        %556 = vmatprep.subr.mxu0 0.0
        %557 = vmatpush1.msra.mxu0 0.0
        %558 = vmatprep.subr.mxu0 0.0
        %559 = vmatpush1.msra.mxu0 0.0
        %560 = vmatprep.subr.mxu0 0.0
        %561 = vmatpush1.msra.mxu0 0.0
        %562 = vmatprep.subr.mxu0 0.0
        %563 = vmatpush1.msra.mxu0 0.0
        %564 = vmatprep.subr.mxu0 0.0
        %565 = vmatpush1.msra.mxu0 0.0
        %566 = vmatprep.subr.mxu0 0.0
        %567 = vmatpush1.msra.mxu0 0.0
        %568 = vmatprep.subr.mxu0 0.0
        %569 = vmatpush1.msra.mxu0 0.0
        %570 = vmatprep.subr.mxu0 0.0
        %571 = vmatpush1.msra.mxu0 0.0
        %572 = vmatprep.subr.mxu0 0.0
        %573 = vmatpush1.msra.mxu0 0.0
        %574 = vmatprep.subr.mxu0 0.0
        %575 = vmatpush1.msra.mxu0 0.0
        %576 = vmatprep.subr.mxu0 0.0
        %577 = vmatpush1.msra.mxu0 0.0
        %578 = vmatprep.subr.mxu0 0.0
        %579 = vmatpush1.msra.mxu0 0.0
        %580 = vmatprep.subr.mxu0 0.0
        %581 = vmatpush1.msra.mxu0 0.0
        %582 = vmatprep.subr.mxu0 0.0
        %583 = vmatpush1.msra.mxu0 0.0
        %584 = vmatprep.subr.mxu0 0.0
        %585 = vmatpush1.msra.mxu0 0.0
        %586 = vmatprep.subr.mxu0 0.0
        %587 = vmatpush1.msra.mxu0 0.0
        %588 = vmatprep.subr.mxu0 0.0
        %589 = vmatpush1.msra.mxu0 0.0
        %590 = vmatprep.subr.mxu0 0.0
        %591 = vmatpush1.msra.mxu0 0.0
        %592 = vmatprep.subr.mxu0 0.0
        %593 = vmatpush1.msra.mxu0 0.0
        %594 = vmatprep.mubr.f32.mxu0 0.0
        %595 = vmatmul.mubr.f32.gmra.mrb[0].mxu0 %v525
        %v596 = vpop.f32.mrb[0].mxu0
        %v597 = vadd.f32 %v523, %v596
        %v598 = vpop.f32.mrb[0].mxu0
        %599 = vmatprep.mubr.f32.mxu0 0.0
        %600 = vmatmul.mubr.f32.gmra.mrb[0].mxu0 %v528
        %v601 = vpop.f32.mrb[0].mxu0
        %v602 = vadd.f32 %v523, %v601
        %v603 = vpop.f32.mrb[0].mxu0
        %604 = vdwg.mxu0
        %vm605 = vcmp.ge.f32.partialorder %v597, 0.0
        %vm606 = vcmp.ge.f32.partialorder %v602, 0.0
        %v607 = vld [vmem:[%s4 + $0x1] sm:$0x1]
        %v608 = vlaneseq
        %v609 = vshrl.u32 %v608, 7
        %v610 = vsub.s32 0, %v609
        %v611 = vrot.slane %v607, %v610
        %v612 = vmul.f32 %v611, %v597
        %v613 = vmul.f32 %v611, %v602
        %v614 = vsel %vm605, %v597, %v612
        %v615 = vsel %vm606, %v602, %v613
        %v616 = vld [vmem:[#allocation8] sm:$0xff]
        %v617 = vld [vmem:[#allocation8 + $0x8] sm:$0xff]
        %v618 = vld [vmem:[#allocation8 + $0x10] sm:$0xff]
        %v619 = vld [vmem:[#allocation8 + $0x18] sm:$0xff]
        %v620 = vld [vmem:[#allocation8 + $0x20] sm:$0xff]
        %v621 = vld [vmem:[#allocation8 + $0x28] sm:$0xff]
        %v622 = vld [vmem:[#allocation8 + $0x30] sm:$0xff]
        %v623 = vld [vmem:[#allocation8 + $0x38] sm:$0xff]
        %v624 = vld [vmem:[#allocation8 + $0x40] sm:$0xff]
        %v625 = vld [vmem:[#allocation8 + $0x48] sm:$0xff]
        %v626 = vld [vmem:[#allocation8 + $0x50] sm:$0xff]
        %v627 = vld [vmem:[#allocation8 + $0x58] sm:$0xff]
        %v628 = vld [vmem:[#allocation8 + $0x60] sm:$0xff]
        %v629 = vld [vmem:[#allocation8 + $0x68] sm:$0xff]
        %v630 = vld [vmem:[#allocation8 + $0x70] sm:$0xff]
        %v631 = vld [vmem:[#allocation8 + $0x78] sm:$0xff]
        %v632 = vld [vmem:[#allocation8 + $0x80] sm:$0xff]
        %v633 = vld [vmem:[#allocation8 + $0x88] sm:$0xff]
        %v634 = vld [vmem:[#allocation8 + $0x90] sm:$0xff]
        %v635 = vld [vmem:[#allocation8 + $0x98] sm:$0xff]
        %v636 = vld [vmem:[#allocation8 + $0xa0] sm:$0xff]
        %v637 = vld [vmem:[#allocation8 + $0xa8] sm:$0xff]
        %v638 = vld [vmem:[#allocation8 + $0xb0] sm:$0xff]
        %v639 = vld [vmem:[#allocation8 + $0xb8] sm:$0xff]
        %v640 = vld [vmem:[#allocation8 + $0xc0] sm:$0xff]
        %v641 = vld [vmem:[#allocation8 + $0xc8] sm:$0xff]
        %v642 = vld [vmem:[#allocation8 + $0xd0] sm:$0xff]
        %v643 = vld [vmem:[#allocation8 + $0xd8] sm:$0xff]
        %v644 = vld [vmem:[#allocation8 + $0xe0] sm:$0xff]
        %v645 = vld [vmem:[#allocation8 + $0xe8] sm:$0xff]
        %v646 = vld [vmem:[#allocation8 + $0xf0] sm:$0xff]
        %v647 = vld [vmem:[#allocation8 + $0xf8] sm:$0xff]
        %v648 = vld [vmem:[%s6] ss:$2 sm:$0x3]
        %v650 = vlaneseq
        %v651 = vshrl.u32 %v650, 7
        %v652 = vsub.s32 0, %v651
        %v653 = vrot.slane %v648, %v652
        %v654 = vlaneseq
        %v655 = vshrl.u32 %v654, 7
        %v656 = vsub.s32 1, %v655
        %v657 = vrot.slane %v648, %v656
        %660 = vmatprep.subr.mxu0 %v617
        %661 = vmatpush1.msra.mxu0 %v616
        %662 = vmatprep.subr.mxu0 %v619
        %663 = vmatpush1.msra.mxu0 %v618
        %664 = vmatprep.subr.mxu0 %v621
        %665 = vmatpush1.msra.mxu0 %v620
        %666 = vmatprep.subr.mxu0 %v623
        %667 = vmatpush1.msra.mxu0 %v622
        %668 = vmatprep.subr.mxu0 %v625
        %669 = vmatpush1.msra.mxu0 %v624
        %670 = vmatprep.subr.mxu0 %v627
        %671 = vmatpush1.msra.mxu0 %v626
        %672 = vmatprep.subr.mxu0 %v629
        %673 = vmatpush1.msra.mxu0 %v628
        %674 = vmatprep.subr.mxu0 %v631
        %675 = vmatpush1.msra.mxu0 %v630
        %676 = vmatprep.subr.mxu0 %v633
        %677 = vmatpush1.msra.mxu0 %v632
        %678 = vmatprep.subr.mxu0 %v635
        %679 = vmatpush1.msra.mxu0 %v634
        %680 = vmatprep.subr.mxu0 %v637
        %681 = vmatpush1.msra.mxu0 %v636
        %682 = vmatprep.subr.mxu0 %v639
        %683 = vmatpush1.msra.mxu0 %v638
        %684 = vmatprep.subr.mxu0 %v641
        %685 = vmatpush1.msra.mxu0 %v640
        %686 = vmatprep.subr.mxu0 %v643
        %687 = vmatpush1.msra.mxu0 %v642
        %688 = vmatprep.subr.mxu0 %v645
        %689 = vmatpush1.msra.mxu0 %v644
        %690 = vmatprep.subr.mxu0 %v647
        %691 = vmatpush1.msra.mxu0 %v646
        %692 = vmatprep.subr.mxu0 0.0
        %693 = vmatpush1.msra.mxu0 0.0
        %694 = vmatprep.subr.mxu0 0.0
        %695 = vmatpush1.msra.mxu0 0.0
        %696 = vmatprep.subr.mxu0 0.0
        %697 = vmatpush1.msra.mxu0 0.0
        %698 = vmatprep.subr.mxu0 0.0
        %699 = vmatpush1.msra.mxu0 0.0
        %700 = vmatprep.subr.mxu0 0.0
        %701 = vmatpush1.msra.mxu0 0.0
        %702 = vmatprep.subr.mxu0 0.0
        %703 = vmatpush1.msra.mxu0 0.0
        %704 = vmatprep.subr.mxu0 0.0
        %705 = vmatpush1.msra.mxu0 0.0
        %706 = vmatprep.subr.mxu0 0.0
        %707 = vmatpush1.msra.mxu0 0.0
        %708 = vmatprep.subr.mxu0 0.0
        %709 = vmatpush1.msra.mxu0 0.0
        %710 = vmatprep.subr.mxu0 0.0
        %711 = vmatpush1.msra.mxu0 0.0
        %712 = vmatprep.subr.mxu0 0.0
        %713 = vmatpush1.msra.mxu0 0.0
        %714 = vmatprep.subr.mxu0 0.0
        %715 = vmatpush1.msra.mxu0 0.0
        %716 = vmatprep.subr.mxu0 0.0
        %717 = vmatpush1.msra.mxu0 0.0
        %718 = vmatprep.subr.mxu0 0.0
        %719 = vmatpush1.msra.mxu0 0.0
        %720 = vmatprep.subr.mxu0 0.0
        %721 = vmatpush1.msra.mxu0 0.0
        %722 = vmatprep.subr.mxu0 0.0
        %723 = vmatpush1.msra.mxu0 0.0
        %724 = vmatprep.mubr.f32.mxu0 0.0
        %725 = vmatmul.mubr.f32.gmra.mrb[0].mxu0 %v614
        %v726 = vpop.f32.mrb[0].mxu0
        %v727 = vadd.f32 %v653, %v726
        %v728 = vpop.f32.mrb[0].mxu0
        %v729 = vadd.f32 %v657, %v728
        %730 = vmatprep.mubr.f32.mxu0 0.0
        %731 = vmatmul.mubr.f32.gmra.mrb[0].mxu0 %v615
        %v732 = vpop.f32.mrb[0].mxu0
        %v733 = vadd.f32 %v653, %v732
        %v734 = vpop.f32.mrb[0].mxu0
        %v735 = vadd.f32 %v657, %v734
        %736 = vdwg.mxu0
        %vm737 = vcmp.ge.f32.partialorder %v727, 0.0
        %vm738 = vcmp.ge.f32.partialorder %v729, 0.0
        %vm739 = vcmp.ge.f32.partialorder %v733, 0.0
        %vm740 = vcmp.ge.f32.partialorder %v735, 0.0
        %s741 = scalar_lea.vmem %s6, 1
        %v742 = vld [vmem:[%s741] ss:$2 sm:$0x3]
        %v744 = vlaneseq
        %v745 = vshrl.u32 %v744, 7
        %v746 = vsub.s32 0, %v745
        %v747 = vrot.slane %v742, %v746
        %v748 = vlaneseq
        %v749 = vshrl.u32 %v748, 7
        %v750 = vsub.s32 1, %v749
        %v751 = vrot.slane %v742, %v750
        %v754 = vmul.f32 %v747, %v727
        %v755 = vmul.f32 %v751, %v729
        %v756 = vmul.f32 %v747, %v733
        %v757 = vmul.f32 %v751, %v735
        %v758 = vsel %vm737, %v727, %v754
        %v759 = vsel %vm738, %v729, %v755
        %v760 = vsel %vm739, %v733, %v756
        %v761 = vsel %vm740, %v735, %v757
        %v762 = vld [vmem:[#allocation10] sm:$0xff]
        %v763 = vld [vmem:[#allocation10 + $0x8] sm:$0xff]
        %v764 = vld [vmem:[#allocation10 + $0x10] sm:$0xff]
        %v765 = vld [vmem:[#allocation10 + $0x18] sm:$0xff]
        %v766 = vld [vmem:[#allocation10 + $0x20] sm:$0xff]
        %v767 = vld [vmem:[#allocation10 + $0x28] sm:$0xff]
        %v768 = vld [vmem:[#allocation10 + $0x30] sm:$0xff]
        %v769 = vld [vmem:[#allocation10 + $0x38] sm:$0xff]
        %v770 = vld [vmem:[#allocation10 + $0x40] sm:$0xff]
        %v771 = vld [vmem:[#allocation10 + $0x48] sm:$0xff]
        %v772 = vld [vmem:[#allocation10 + $0x50] sm:$0xff]
        %v773 = vld [vmem:[#allocation10 + $0x58] sm:$0xff]
        %v774 = vld [vmem:[#allocation10 + $0x60] sm:$0xff]
        %v775 = vld [vmem:[#allocation10 + $0x68] sm:$0xff]
        %v776 = vld [vmem:[#allocation10 + $0x70] sm:$0xff]
        %v777 = vld [vmem:[#allocation10 + $0x78] sm:$0xff]
        %v778 = vld [vmem:[#allocation10 + $0x80] sm:$0xff]
        %v779 = vld [vmem:[#allocation10 + $0x88] sm:$0xff]
        %v780 = vld [vmem:[#allocation10 + $0x90] sm:$0xff]
        %v781 = vld [vmem:[#allocation10 + $0x98] sm:$0xff]
        %v782 = vld [vmem:[#allocation10 + $0xa0] sm:$0xff]
        %v783 = vld [vmem:[#allocation10 + $0xa8] sm:$0xff]
        %v784 = vld [vmem:[#allocation10 + $0xb0] sm:$0xff]
        %v785 = vld [vmem:[#allocation10 + $0xb8] sm:$0xff]
        %v786 = vld [vmem:[#allocation10 + $0xc0] sm:$0xff]
        %v787 = vld [vmem:[#allocation10 + $0xc8] sm:$0xff]
        %v788 = vld [vmem:[#allocation10 + $0xd0] sm:$0xff]
        %v789 = vld [vmem:[#allocation10 + $0xd8] sm:$0xff]
        %v790 = vld [vmem:[#allocation10 + $0xe0] sm:$0xff]
        %v791 = vld [vmem:[#allocation10 + $0xe8] sm:$0xff]
        %v792 = vld [vmem:[#allocation10 + $0xf0] sm:$0xff]
        %v793 = vld [vmem:[#allocation10 + $0xf8] sm:$0xff]
        %v794 = vld [vmem:[#allocation10 + $0x100] sm:$0xff]
        %v795 = vld [vmem:[#allocation10 + $0x108] sm:$0xff]
        %v796 = vld [vmem:[#allocation10 + $0x110] sm:$0xff]
        %v797 = vld [vmem:[#allocation10 + $0x118] sm:$0xff]
        %v798 = vld [vmem:[#allocation10 + $0x120] sm:$0xff]
        %v799 = vld [vmem:[#allocation10 + $0x128] sm:$0xff]
        %v800 = vld [vmem:[#allocation10 + $0x130] sm:$0xff]
        %v801 = vld [vmem:[#allocation10 + $0x138] sm:$0xff]
        %v802 = vld [vmem:[#allocation10 + $0x140] sm:$0xff]
        %v803 = vld [vmem:[#allocation10 + $0x148] sm:$0xff]
        %v804 = vld [vmem:[#allocation10 + $0x150] sm:$0xff]
        %v805 = vld [vmem:[#allocation10 + $0x158] sm:$0xff]
        %v806 = vld [vmem:[#allocation10 + $0x160] sm:$0xff]
        %v807 = vld [vmem:[#allocation10 + $0x168] sm:$0xff]
        %v808 = vld [vmem:[#allocation10 + $0x170] sm:$0xff]
        %v809 = vld [vmem:[#allocation10 + $0x178] sm:$0xff]
        %v810 = vld [vmem:[#allocation10 + $0x180] sm:$0xff]
        %v811 = vld [vmem:[#allocation10 + $0x188] sm:$0xff]
        %v812 = vld [vmem:[#allocation10 + $0x190] sm:$0xff]
        %v813 = vld [vmem:[#allocation10 + $0x198] sm:$0xff]
        %v814 = vld [vmem:[#allocation10 + $0x1a0] sm:$0xff]
        %v815 = vld [vmem:[#allocation10 + $0x1a8] sm:$0xff]
        %v816 = vld [vmem:[#allocation10 + $0x1b0] sm:$0xff]
        %v817 = vld [vmem:[#allocation10 + $0x1b8] sm:$0xff]
        %v818 = vld [vmem:[#allocation10 + $0x1c0] sm:$0xff]
        %v819 = vld [vmem:[#allocation10 + $0x1c8] sm:$0xff]
        %v820 = vld [vmem:[#allocation10 + $0x1d0] sm:$0xff]
        %v821 = vld [vmem:[#allocation10 + $0x1d8] sm:$0xff]
        %v822 = vld [vmem:[#allocation10 + $0x1e0] sm:$0xff]
        %v823 = vld [vmem:[#allocation10 + $0x1e8] sm:$0xff]
        %v824 = vld [vmem:[#allocation10 + $0x1f0] sm:$0xff]
        %v825 = vld [vmem:[#allocation10 + $0x1f8] sm:$0xff]
        %v826 = vld [vmem:[%s8] sm:$0x3]
        %v828 = vlaneseq
        %v829 = vshrl.u32 %v828, 7
        %v830 = vsub.s32 0, %v829
        %v831 = vrot.slane %v826, %v830
        %v832 = vlaneseq
        %v833 = vshrl.u32 %v832, 7
        %v834 = vsub.s32 1, %v833
        %v835 = vrot.slane %v826, %v834
        %838 = vmatprep.subr.mxu0 %v763
        %839 = vmatpush1.msra.mxu0 %v762
        %840 = vmatprep.subr.mxu0 %v765
        %841 = vmatpush1.msra.mxu0 %v764
        %842 = vmatprep.subr.mxu0 %v767
        %843 = vmatpush1.msra.mxu0 %v766
        %844 = vmatprep.subr.mxu0 %v769
        %845 = vmatpush1.msra.mxu0 %v768
        %846 = vmatprep.subr.mxu0 %v771
        %847 = vmatpush1.msra.mxu0 %v770
        %848 = vmatprep.subr.mxu0 %v773
        %849 = vmatpush1.msra.mxu0 %v772
        %850 = vmatprep.subr.mxu0 %v775
        %851 = vmatpush1.msra.mxu0 %v774
        %852 = vmatprep.subr.mxu0 %v777
        %853 = vmatpush1.msra.mxu0 %v776
        %854 = vmatprep.subr.mxu0 %v779
        %855 = vmatpush1.msra.mxu0 %v778
        %856 = vmatprep.subr.mxu0 %v781
        %857 = vmatpush1.msra.mxu0 %v780
        %858 = vmatprep.subr.mxu0 %v783
        %859 = vmatpush1.msra.mxu0 %v782
        %860 = vmatprep.subr.mxu0 %v785
        %861 = vmatpush1.msra.mxu0 %v784
        %862 = vmatprep.subr.mxu0 %v787
        %863 = vmatpush1.msra.mxu0 %v786
        %864 = vmatprep.subr.mxu0 %v789
        %865 = vmatpush1.msra.mxu0 %v788
        %866 = vmatprep.subr.mxu0 %v791
        %867 = vmatpush1.msra.mxu0 %v790
        %868 = vmatprep.subr.mxu0 %v793
        %869 = vmatpush1.msra.mxu0 %v792
        %870 = vmatprep.subr.mxu0 %v795
        %871 = vmatpush1.msra.mxu0 %v794
        %872 = vmatprep.subr.mxu0 %v797
        %873 = vmatpush1.msra.mxu0 %v796
        %874 = vmatprep.subr.mxu0 %v799
        %875 = vmatpush1.msra.mxu0 %v798
        %876 = vmatprep.subr.mxu0 %v801
        %877 = vmatpush1.msra.mxu0 %v800
        %878 = vmatprep.subr.mxu0 %v803
        %879 = vmatpush1.msra.mxu0 %v802
        %880 = vmatprep.subr.mxu0 %v805
        %881 = vmatpush1.msra.mxu0 %v804
        %882 = vmatprep.subr.mxu0 %v807
        %883 = vmatpush1.msra.mxu0 %v806
        %884 = vmatprep.subr.mxu0 %v809
        %885 = vmatpush1.msra.mxu0 %v808
        %886 = vmatprep.subr.mxu0 %v811
        %887 = vmatpush1.msra.mxu0 %v810
        %888 = vmatprep.subr.mxu0 %v813
        %889 = vmatpush1.msra.mxu0 %v812
        %890 = vmatprep.subr.mxu0 %v815
        %891 = vmatpush1.msra.mxu0 %v814
        %892 = vmatprep.subr.mxu0 %v817
        %893 = vmatpush1.msra.mxu0 %v816
        %894 = vmatprep.subr.mxu0 %v819
        %895 = vmatpush1.msra.mxu0 %v818
        %896 = vmatprep.subr.mxu0 %v821
        %897 = vmatpush1.msra.mxu0 %v820
        %898 = vmatprep.subr.mxu0 %v823
        %899 = vmatpush1.msra.mxu0 %v822
        %900 = vmatprep.subr.mxu0 %v825
        %901 = vmatpush1.msra.mxu0 %v824
        %902 = vmatprep.mubr.f32.mxu0 %v759
        %903 = vmatmul.mubr.f32.gmra.mrb[0].mxu0 %v758
        %v904 = vpop.f32.mrb[0].mxu0
        %v905 = vadd.f32 %v831, %v904
        %v906 = vpop.f32.mrb[0].mxu0
        %v907 = vadd.f32 %v835, %v906
        %908 = vmatprep.mubr.f32.mxu0 %v761
        %909 = vmatmul.mubr.f32.gmra.mrb[0].mxu0 %v760
        %v910 = vpop.f32.mrb[0].mxu0
        %v911 = vadd.f32 %v831, %v910
        %v912 = vpop.f32.mrb[0].mxu0
        %v913 = vadd.f32 %v835, %v912
        %914 = vdwg.mxu0
        %915 = vst [vmem:[%s408] sm:$0xff] %v905
        %916 = vst [vmem:[%s408 + $0x8] sm:$0xff] %v907
        %917 = vst [vmem:[%s408 + $0x10] sm:$0xff] %v911
        %918 = vst [vmem:[%s408 + $0x18] sm:$0xff] %v913
        %s919 = sand.u32 %s230, 1
        %s920 = scalar_lea.sflag [#allocation4], %s919
        %s921 = sand.u32 %s230, 1
        %s922 = smul.addr %s921, 32
        %s923 = scalar_lea.vmem [#allocation11], %s922
        // Predicated region
        $region77: #{tpu_custom_call.1} parent=55 // pred_check
          %p924 = pneg %p240
        $region78: #{tpu_custom_call.1} parent=55 // pred_check_branch
          %926 = sbr.rel (%p924) target = $region80
        $region79: #{tpu_custom_call.1} parent=55 // pred_region
          %s927 = smul.u32 2, %s28
          %s929 = ssub.s32 512, 512
          %930 = vsyncadd %s920, %s929
          %s931 = smul.addr %s927, 2
          %s932 = smul.addr %s931, 128
          %s933 = scalar_lea.hbm %s9, %s932
          %s934 = sshll.u32 %s923, 4
          %s935 = int_to_ptr.vmem [resolvable:$true] %s934
          %940 = dma.vmem_to_hbm [thread:$0]  %s935, 512, %s933, %s920, 256, 256, 16
        $region80: #{tpu_custom_call.1} parent=55 // pred_fallthru
          _
      $region56: #{tpu_custom_call.1} parent=5 // pred_fallthru
        _
      %p941 = scmp.le.s32.totalorder 2, %s23
      // Predicated region
      $region81: #{tpu_custom_call.1} parent=5 // pred_check
        %p942 = pneg %p941
      $region82: #{tpu_custom_call.1} parent=5 // pred_check_branch
        %944 = sbr.rel (%p942) target = $region84
      $region83: #{tpu_custom_call.1} parent=5 // pred_region
        %s945 = ssub.s32 %s23, 2
        // Predicated region
        $region85: #{tpu_custom_call.1} parent=83 // pred_check
          %p946 = pneg %p246
        $region86: #{tpu_custom_call.1} parent=83 // pred_check_branch
          %948 = sbr.rel (%p946) target = $region88
        $region87: #{tpu_custom_call.1} parent=83 // pred_region
          %s949 = sand.u32 %s231, 1
          %s950 = scalar_lea.sflag [#allocation4], %s949
          %s951 = sand.u32 %s231, 1
          %s952 = smul.addr %s951, 32
          %s953 = scalar_lea.vmem [#allocation11], %s952
          %954 = dma.done %s950, 512
        $region88: #{tpu_custom_call.1} parent=83 // pred_fallthru
          _
      $region84: #{tpu_custom_call.1} parent=5 // pred_fallthru
        _
    $region6: #{tpu_custom_call.1} parent=1 // loop_footer
      %s27 = sadd.s32 1, %s23
    $region7: #{tpu_custom_call.1} parent=1 // loop_footer_branch
      %22 = sbr.rel target = $region3
    $region8: #{tpu_custom_call.1} parent=1 // loop_exit
      _
    %955 = vsyncpa [#allocation3], 1
    %s956 = scalar_lea.sflag [#allocation3], 1
    %957 = vsyncpa %s956, 1
    %958 = vsyncpa [#allocation6], 1
    %959 = vsyncpa [#allocation9], 1
    %960 = vsyncpa [#allocation4], 1
    %s961 = scalar_lea.sflag [#allocation4], 1
    %962 = vsyncpa %s961, 1

</llo_original>
